<compile_context>
chip_gen: v5e
topology: v5e:2x2
jax: 0.10.0
libtpu: 0.0.40
codegen_flags: <defaults>
</compile_context>

<pallas_src>
from functools import partial

import jax
import jax.numpy as jnp
import numpy as np
from jax.experimental import pallas as pl
from jax.experimental.pallas import tpu as pltpu


def _gap_kernel(x_ref, o_ref, acc_ref, *, inv_s, s_total, t_s, needs_mask):
    """x_ref: (t_r, t_s) input chunk; o_ref: (t_r, 1); acc_ref: (t_r, 1) f32 scratch."""
    k = pl.program_id(1)
    k_last = pl.num_programs(1) - 1

    @pl.when(k == 0)
    def _():
        acc_ref[...] = jnp.zeros_like(acc_ref)

    x = x_ref[...].astype(jnp.float32)  # accumulate in f32 regardless of input dtype

    if needs_mask:
        # Only the final S chunk can read past S; keep the common path cheap.
        @pl.when(k != k_last)
        def _():
            acc_ref[...] += jnp.sum(x, axis=-1, keepdims=True)

        @pl.when(k == k_last)
        def _():
            col = k * t_s + jax.lax.broadcasted_iota(jnp.int32, x.shape, 1)
            xm = jnp.where(col < s_total, x, 0.0)
            acc_ref[...] += jnp.sum(xm, axis=-1, keepdims=True)
    else:
        acc_ref[...] += jnp.sum(x, axis=-1, keepdims=True)

    @pl.when(k == k_last)
    def _():
        o_ref[...] = (acc_ref[...] * inv_s).astype(o_ref.dtype)


def _vmem_capacity_bytes():
    """Physical per-core VMEM (falls back to the smallest real part, v7x 64 MiB)."""
    try:
        info = pltpu.get_tpu_info()
        cap = getattr(info, "vmem_capacity_bytes", None)
        if cap:
            return int(cap)
    except Exception:
        pass
    return 64 * 1024 * 1024


def _choose_tiles(R, S, itemsize, budget):
    """Pick (t_r, t_s) so resident blocks (2x native buf + f32 temp) fit `budget`."""
    align = max(8, 32 // itemsize)       # sublane alignment per dtype (8 f32, 16 bf16)
    elem_bytes = 2 * itemsize + 4        # double-buffered native input + f32 upcast temp
    min_rows = min(R, align)

    # Spatial tile: full S if it fits for `min_rows` rows, else a multiple of 128.
    if S * min_rows * elem_bytes <= budget:
        t_s = S
    else:
        t_s = (budget // (min_rows * elem_bytes) // 128) * 128
        t_s = max(128, min(t_s, S))

    rows_fit = max(min_rows, budget // (t_s * elem_bytes))
    if rows_fit >= R:
        t_r = R
    else:
        t_r = max(align, (rows_fit // align) * align)

    # Keep >= 2 row blocks so the "parallel" axis can shard across v7x's two
    # TensorCores (perf-neutral on single-TC v5e/v6e).
    if R >= 2 * align:
        half = ((R // 2) // align) * align
        if half >= align:
            t_r = min(t_r, half)

    return t_r, t_s


def fast_global_avg_pool3d(x, flatten=False, *, block_budget_bytes=None):
    """x: (B, C, D, H, W) -> (B, C, 1, 1, 1) [flatten=False] or (B, C) [flatten=True]."""
    B, C, D, H, W = x.shape
    S = D * H * W
    R = B * C
    xr = x.reshape(R, S)
    itemsize = x.dtype.itemsize

    cap = _vmem_capacity_bytes()
    if block_budget_bytes is None:
        # 48 MiB on 128 MiB parts (v5e/v6e), 24 MiB on 64 MiB v7x.
        block_budget_bytes = cap * 3 // 8

    t_r, t_s = _choose_tiles(R, S, itemsize, block_budget_bytes)
    grid = (pl.cdiv(R, t_r), pl.cdiv(S, t_s))

    # Explicit scoped-VMEM limit: large enough for the chosen blocks + headroom,
    # never above 7/8 of physical VMEM (v5e's 16 MiB default would otherwise OOM).
    used = t_r * t_s * (2 * itemsize + 4) + t_r * 128 * 8  # blocks + scratch/out slack
    vmem_limit = int(min(cap * 7 // 8, max(32 << 20, used + (16 << 20))))

    out_r1 = pl.pallas_call(
        partial(
            _gap_kernel,
            inv_s=1.0 / float(S),
            s_total=S,
            t_s=t_s,
            needs_mask=(S % t_s != 0),
        ),
        out_shape=jax.ShapeDtypeStruct((R, 1), x.dtype),
        grid=grid,
        in_specs=[pl.BlockSpec((t_r, t_s), lambda r, k: (r, k))],
        out_specs=pl.BlockSpec((t_r, 1), lambda r, k: (r, 0)),
        scratch_shapes=[pltpu.VMEM((t_r, 1), jnp.float32)],
        compiler_params=pltpu.CompilerParams(
            dimension_semantics=("parallel", "arbitrary"),
            vmem_limit_bytes=vmem_limit,
        ),
        cost_estimate=pl.CostEstimate(
            flops=R * S,
            transcendentals=0,
            bytes_accessed=R * S * itemsize + R * itemsize,
        ),
    )(xr)

    out = out_r1.reshape(B, C)
    if flatten:
        return out
    return out.reshape(B, C, 1, 1, 1)


if __name__ == "__main__":
    key = jax.random.PRNGKey(0)
    k1, k2 = jax.random.split(key)

    # --- Case 1: small f32 input, both flatten modes (full-S block path). ---
    B, C, D, H, W = 2, 8, 2, 4, 4  # R = 16, S = 32
    x = jax.random.normal(k1, (B, C, D, H, W), dtype=jnp.float32)

    out = fast_global_avg_pool3d(x, flatten=False)       # (B, C, 1, 1, 1)
    out_flat = fast_global_avg_pool3d(x, flatten=True)   # (B, C)
    jax.block_until_ready((out, out_flat))

    ref = jnp.mean(x.reshape(B, C, -1), axis=-1)
    np.testing.assert_allclose(
        np.asarray(out), np.asarray(ref).reshape(B, C, 1, 1, 1), rtol=1e-5, atol=1e-6
    )
    np.testing.assert_allclose(np.asarray(out_flat), np.asarray(ref), rtol=1e-5, atol=1e-6)

    # --- Case 2: force multi-chunk spatial tiling with S % t_s != 0 (mask path). ---
    B2, C2, D2, H2, W2 = 2, 8, 2, 10, 16  # R = 16, S = 320 -> t_s = 128, 3 chunks
    x2 = jax.random.normal(k2, (B2, C2, D2, H2, W2), dtype=jnp.float32)
    out2 = fast_global_avg_pool3d(x2, flatten=True, block_budget_bytes=16 * 1024)
    jax.block_until_ready(out2)
    ref2 = jnp.mean(x2.reshape(B2, C2, -1), axis=-1)
    np.testing.assert_allclose(np.asarray(out2), np.asarray(ref2), rtol=1e-5, atol=1e-6)

    # --- Case 3: bf16 path — native-dtype DMA, f32 accumulation inside the kernel. ---
    x_bf16 = x.astype(jnp.bfloat16)
    out_bf16 = fast_global_avg_pool3d(x_bf16, flatten=True)
    jax.block_until_ready(out_bf16)
    ref_bf16 = jnp.mean(x_bf16.astype(jnp.float32).reshape(B, C, -1), axis=-1)
    np.testing.assert_allclose(
        np.asarray(out_bf16, dtype=np.float32), np.asarray(ref_bf16), rtol=2e-2, atol=1e-2
    )

    print("KERNEL_OK")
</pallas_src>

<mosaic_0001>
module attributes {stable_mosaic.version = 11 : i64} {
  func.func @_gap_kernel(%arg0: i32, %arg1: i32, %arg2: memref<8x32xf32, #tpu.memory_space<vmem>>, %arg3: memref<8x1xf32, #tpu.memory_space<vmem>>, %arg4: memref<8x1xf32, #tpu.memory_space<vmem>>) attributes {dimension_semantics = [#tpu.dimension_semantics<parallel>, #tpu.dimension_semantics<arbitrary>], iteration_bounds = array<i64: 2, 1>, scalar_prefetch = 0 : i64, scratch_operands = 1 : i64, tpu.core_type = #tpu.core_type<tc>, window_params = [{transform_indices = @transform_0, window_bounds = array<i64: 8, 32>}, {transform_indices = @transform_1, window_bounds = array<i64: 8, 1>}]} {
    %c0_i32 = arith.constant 0 : i32
    %0 = arith.cmpi eq, %arg1, %c0_i32 : i32
    %1 = arith.extui %0 : i1 to i32
    %c0_i32_0 = arith.constant 0 : i32
    %2 = arith.cmpi ne, %1, %c0_i32_0 : i32
    scf.if %2 {
      %cst_8 = arith.constant 0.000000e+00 : f32
      %12 = vector.broadcast %cst_8 : f32 to vector<8x1xf32>
      %c0_9 = arith.constant 0 : index
      %c0_10 = arith.constant 0 : index
      %13 = vector.load %arg4[%c0_9, %c0_10] : memref<8x1xf32, #tpu.memory_space<vmem>>, vector<8x1xf32>
      tpu.vector_store %arg4[%c0_9, %c0_10], %12 {strides = array<i32>} : memref<8x1xf32, #tpu.memory_space<vmem>>, vector<8x1xf32>,
    } else {
    }
    %c0 = arith.constant 0 : index
    %c0_1 = arith.constant 0 : index
    %3 = vector.load %arg2[%c0, %c0_1] : memref<8x32xf32, #tpu.memory_space<vmem>>, vector<8x32xf32>
    %c0_2 = arith.constant 0 : index
    %c0_3 = arith.constant 0 : index
    %4 = vector.load %arg4[%c0_2, %c0_3] : memref<8x1xf32, #tpu.memory_space<vmem>>, vector<8x1xf32>
    %cst = arith.constant dense<0.000000e+00> : vector<8xf32>
    %5 = vector.multi_reduction <add>, %3, %cst [1] : vector<8x32xf32> to vector<8xf32>
    %6 = vector.shape_cast %5 : vector<8xf32> to vector<8x1xf32>
    %7 = arith.addf %4, %6 : vector<8x1xf32>
    %c0_4 = arith.constant 0 : index
    %c0_5 = arith.constant 0 : index
    %8 = vector.load %arg4[%c0_4, %c0_5] : memref<8x1xf32, #tpu.memory_space<vmem>>, vector<8x1xf32>
    tpu.vector_store %arg4[%c0_4, %c0_5], %7 {strides = array<i32>} : memref<8x1xf32, #tpu.memory_space<vmem>>, vector<8x1xf32>,
    %c0_i32_6 = arith.constant 0 : i32
    %9 = arith.cmpi eq, %arg1, %c0_i32_6 : i32
    %10 = arith.extui %9 : i1 to i32
    %c0_i32_7 = arith.constant 0 : i32
    %11 = arith.cmpi ne, %10, %c0_i32_7 : i32
    scf.if %11 {
      %c0_8 = arith.constant 0 : index
      %c0_9 = arith.constant 0 : index
      %12 = vector.load %arg4[%c0_8, %c0_9] : memref<8x1xf32, #tpu.memory_space<vmem>>, vector<8x1xf32>
      %cst_10 = arith.constant 3.125000e-02 : f32
      %13 = vector.broadcast %cst_10 : f32 to vector<8x1xf32>
      %14 = arith.mulf %12, %13 : vector<8x1xf32>
      %c0_11 = arith.constant 0 : index
      %c0_12 = arith.constant 0 : index
      %15 = vector.load %arg3[%c0_11, %c0_12] : memref<8x1xf32, #tpu.memory_space<vmem>>, vector<8x1xf32>
      tpu.vector_store %arg3[%c0_11, %c0_12], %14 {strides = array<i32>} : memref<8x1xf32, #tpu.memory_space<vmem>>, vector<8x1xf32>,
    } else {
    }
    return
  }
  func.func @transform_0(%arg0: i32, %arg1: i32) -> (i32, i32) {
    %c0_i32 = arith.constant 0 : i32
    return %arg0, %arg1 : i32, i32
  }
  func.func @transform_1(%arg0: i32, %arg1: i32) -> (i32, i32) {
    %c0_i32 = arith.constant 0 : i32
    %c0_i32_0 = arith.constant 0 : i32
    return %arg0, %c0_i32 : i32, i32
  }
}

</mosaic_0001>

<llo_original>
// kernel: tpu_custom_call.1
$region0: #{tpu_custom_call.1}
  #allocation0 [shape = 'u32[]', space=smem, size = 0x4, offset = 0x4, fixed_abs, tag = 'smem constant byte address 0x4 - core index']
  #allocation1 [shape = 'u32[72,128]{1,0:T(1,128)}', space=vmem, size = 0x9000, scoped, tag = 'internal scratch']
  #allocation2 [shape = 'f32[8,1]{1,0:T(8,128)}', space=vmem, size = 0x1000, scoped, tag = 'scratch operand']
  %s0 = inlined_call_operand.hbm [shape: f32[16,32], index: 0, kind: input, shape index: {}]
  %s1 = inlined_call_operand.vmem [shape: f32[16,1], index: 1, kind: output, shape index: {}]
  %s2 = sld [smem:[#allocation0]]
  $region49: #{tpu_custom_call.1} parent=0
    _
  %s4 = ssub.s32 1, %s2
  %s5 = scalar_select 0, %s4, %s2
  $region1: #{tpu_custom_call.1} parent=0
    #allocation3 [shape = 'u8[8192]{0}', space=vmem, size = 0x2000, scoped, tag = 'input window, operand 0']
    #allocation4 [shape = 's32[2]{0}', space=sflag, size = 0x8, scoped, tag = 'scoped memory for tpu_custom_call.1']
    %6 = vsyncpa [#allocation4], 0
    %s7 = scalar_lea.sflag [#allocation4], 1
    %8 = vsyncpa %s7, 0
    loop: start=0, step=1, limit=4
    $region2: #{tpu_custom_call.1} parent=1 // loop_pre_header
      _
    $region3: #{tpu_custom_call.1} parent=1 // loop_header
      %s10 = sphi 0, %s14
      %p11 = scmp.ge.s32.totalorder %s10, 4
      %s17 = sphi 0, %s29
      %s18 = sphi 0, %s25
      %s19 = sphi 0, %s17
      %s20 = sphi 0, %s18
      %s21 = sphi 0, %s19
      %s22 = sphi 0, %s20
      %s34 = sphi 0, %s36
      %s37 = sphi 0, %s34
      %s38 = sphi 0, %s37
      %s54 = sphi 0, %s38
      %s60 = sphi 0, %s62
      %s63 = sphi 0, %s60
      %s64 = sphi 0, %s63
      %s80 = sphi 0, %s64
    $region4: #{tpu_custom_call.1} parent=1 // loop_header_branch
      %13 = sbr.rel (%p11) target = $region8
    $region5: #{tpu_custom_call.1} parent=1 // loop_body
      %s15 = ssub.s32 %s10, 1
      %s16 = ssub.s32 %s10, 2
      %s23 = sadd.s32 1, %s18
      %p24 = scmp.ge.s32.totalorder %s23, 1
      %s25 = scalar_select %p24, 0, %s23
      %s26 = sadd.s32 1, %s17
      %s27 = scalar_select %p24, %s26, %s17
      %p28 = scmp.ge.s32.totalorder %s27, 2
      %s29 = scalar_select %p28, 0, %s27
      %s30 = ssub.s32 %s17, %s29
      %s31 = ssub.s32 %s18, %s25
      %s32 = sor.u32 %s30, %s31
      %p33 = scmp.eq.s32.totalorder %s32, 0
      %s35 = sadd.s32 %s34, 1
      %s36 = scalar_select %p33, %s34, %s35
      %p39 = pneg %p33
      %p40 = scmp.eq.s32.totalorder %s10, 1
      %p41 = por %p39, %p40
      %p42 = scmp.ne.s32.totalorder %s34, %s37
      %p43 = scmp.eq.s32.totalorder %s10, 0
      %p44 = por %p42, %p43
      %p45 = scmp.ne.s32.totalorder %s34, %s37
      %p46 = scmp.eq.s32.totalorder %s15, 1
      %p47 = por %p45, %p46
      %p48 = scmp.ne.s32.totalorder %s37, %s38
      %p49 = scmp.eq.s32.totalorder %s15, 0
      %p50 = por %p48, %p49
      %p51 = scmp.ne.s32.totalorder %s37, %s38
      %p52 = scmp.eq.s32.totalorder %s16, 1
      %p53 = por %p51, %p52
      %p55 = scmp.ne.s32.totalorder %s38, %s54
      %p56 = scmp.eq.s32.totalorder %s16, 0
      %p57 = por %p55, %p56
      %s58 = ssub.s32 %s17, %s29
      %p59 = scmp.eq.s32.totalorder %s58, 0
      %s61 = sadd.s32 %s60, 1
      %s62 = scalar_select %p59, %s60, %s61
      %p65 = pneg %p59
      %p66 = scmp.eq.s32.totalorder %s10, 1
      %p67 = por %p65, %p66
      %p68 = scmp.ne.s32.totalorder %s60, %s63
      %p69 = scmp.eq.s32.totalorder %s10, 0
      %p70 = por %p68, %p69
      %p71 = scmp.ne.s32.totalorder %s60, %s63
      %p72 = scmp.eq.s32.totalorder %s15, 1
      %p73 = por %p71, %p72
      %p74 = scmp.ne.s32.totalorder %s63, %s64
      %p75 = scmp.eq.s32.totalorder %s15, 0
      %p76 = por %p74, %p75
      %p77 = scmp.ne.s32.totalorder %s63, %s64
      %p78 = scmp.eq.s32.totalorder %s16, 1
      %p79 = por %p77, %p78
      %p81 = scmp.ne.s32.totalorder %s64, %s80
      %p82 = scmp.eq.s32.totalorder %s16, 0
      %p83 = por %p81, %p82
      %p84 = scmp.le.s32.totalorder 1, %s10
      %p85 = scmp.lt.s32.totalorder %s10, 3
      %p86 = pnand %p84, %p85
      %p87 = pneg %p86
      // Predicated region
      $region9: #{tpu_custom_call.1} parent=5 // pred_check
        _
      $region10: #{tpu_custom_call.1} parent=5 // pred_check_branch
        %89 = sbr.rel (%p86) target = $region12
      $region11: #{tpu_custom_call.1} parent=5 // pred_region
        %s90 = ssub.s32 %s10, 1
      $region12: #{tpu_custom_call.1} parent=5 // pred_fallthru
        _
      %p91 = scmp.lt.s32.totalorder %s10, 2
      // Predicated region
      $region13: #{tpu_custom_call.1} parent=5 // pred_check
        %p92 = pneg %p91
      $region14: #{tpu_custom_call.1} parent=5 // pred_check_branch
        %94 = sbr.rel (%p92) target = $region16
      $region15: #{tpu_custom_call.1} parent=5 // pred_region
        // Predicated region
        $region17: #{tpu_custom_call.1} parent=15 // pred_check
          %p95 = pneg %p44
        $region18: #{tpu_custom_call.1} parent=15 // pred_check_branch
          %97 = sbr.rel (%p95) target = $region20
        $region19: #{tpu_custom_call.1} parent=15 // pred_region
          %s98 = sand.u32 %s34, 1
          %s99 = scalar_lea.sflag [#allocation4], %s98
          %s100 = sand.u32 %s34, 1
          %s101 = smul.addr %s100, 8
          %s102 = scalar_lea.vmem [#allocation3], %s101
          %104 = vsyncadd %s99, 0
          %s105 = sadd.s32 %s18, %s17
          %s106 = smul.addr %s105, 8
          %s107 = scalar_lea.hbm %s0, %s106
          %s109 = sshll.u32 %s107, 4
          %s110 = int_to_ptr.hbm [resolvable:$true] %s109
          %s111 = sshll.u32 %s102, 4
          %s112 = int_to_ptr.vmem [resolvable:$true] %s111
          %114 = dma.hbm_to_vmem [thread:$0]  %s110, 128, %s112, %s99
        $region20: #{tpu_custom_call.1} parent=15 // pred_fallthru
          _
      $region16: #{tpu_custom_call.1} parent=5 // pred_fallthru
        _
      %p115 = scmp.le.s32.totalorder 1, %s10
      %p116 = scmp.lt.s32.totalorder %s10, 3
      %p117 = pnand %p115, %p116
      %p118 = pneg %p117
      // Predicated region
      $region21: #{tpu_custom_call.1} parent=5 // pred_check
        _
      $region22: #{tpu_custom_call.1} parent=5 // pred_check_branch
        %120 = sbr.rel (%p117) target = $region24
      $region23: #{tpu_custom_call.1} parent=5 // pred_region
        %s121 = ssub.s32 %s10, 1
        %s122 = sand.u32 %s37, 1
        %s123 = scalar_lea.sflag [#allocation4], %s122
        %s124 = sand.u32 %s37, 1
        %s125 = smul.addr %s124, 8
        %s126 = scalar_lea.vmem [#allocation3], %s125
        // Predicated region
        $region25: #{tpu_custom_call.1} parent=23 // pred_check
          %p127 = pneg %p50
        $region26: #{tpu_custom_call.1} parent=23 // pred_check_branch
          %129 = sbr.rel (%p127) target = $region28
        $region27: #{tpu_custom_call.1} parent=23 // pred_region
          %131 = dma.done %s123, 128
        $region28: #{tpu_custom_call.1} parent=23 // pred_fallthru
          _
        %s132 = sand.u32 %s37, 1
        %s133 = scalar_lea.sflag [#allocation4], %s132
        %s134 = sand.u32 %s37, 1
        %s135 = smul.addr %s134, 8
        %s136 = scalar_lea.vmem [#allocation3], %s135
        %p137 = pneg %p50
        %p138 = pneg %p47
        %p139 = pneg %p76
        %p140 = pneg %p73
        %p141 = scmp.lt.s32.totalorder %s19, 1
        %s142 = scalar_select %p141, %s19, 1
        %s143 = smul.addr %s142, 8
        %s144 = scalar_lea.vmem %s1, %s143
        %p145 = scmp.lt.s32.totalorder %s19, 1
        %s146 = scalar_select %p145, %s19, 1
        %s147 = smul.addr %s146, 8
        %s148 = scalar_lea.vmem %s1, %s147
        %p149 = scmp.eq.s32.totalorder %s20, 0
        // Predicated region
        $region29: #{tpu_custom_call.1} parent=23 // pred_check
          %p150 = pneg %p149
        $region30: #{tpu_custom_call.1} parent=23 // pred_check_branch
          %152 = sbr.rel (%p150) target = $region32
        $region31: #{tpu_custom_call.1} parent=23 // pred_region
          %vm153 = vcmask 7168
          %154 = vst.msk [vmem:[#allocation2] sm:$0xff] %vm153, 0.0
        $region32: #{tpu_custom_call.1} parent=23 // pred_fallthru
          _
        %v155 = vld [vmem:[%s126] sm:$0xff]
        %v156 = vld [vmem:[#allocation2] sm:$0xff]
        %vm157 = vcmask 261120
        %v158 = vsel %vm157, %v155, 0.0
        %159 = vadd.xlane.f32.xlu0 %v158
        %v160 = vpop.xlane.xlu0 %159
        %v161 = vadd.f32 %v156, %v160
        %vm162 = vcmask 7168
        %163 = vst.msk [vmem:[#allocation2] sm:$0xff] %vm162, %v161
        // Predicated region
        $region33: #{tpu_custom_call.1} parent=23 // pred_check
          %p164 = pneg %p149
        $region34: #{tpu_custom_call.1} parent=23 // pred_check_branch
          %166 = sbr.rel (%p164) target = $region36
        $region35: #{tpu_custom_call.1} parent=23 // pred_region
          %v167 = vld [vmem:[#allocation2] sm:$0xff]
          %v168 = vmul.f32 %v167, 0.03125
          %169 = vst.msk [vmem:[%s148] sm:$0xff] %vm162, %v168
        $region36: #{tpu_custom_call.1} parent=23 // pred_fallthru
          _
        %p170 = scmp.lt.s32.totalorder %s19, 1
        %s171 = scalar_select %p170, %s19, 1
        %s172 = smul.addr %s171, 8
        %s173 = scalar_lea.vmem %s1, %s172
        // Predicated region
        $region37: #{tpu_custom_call.1} parent=23 // pred_check
          %p174 = pneg %p73
        $region38: #{tpu_custom_call.1} parent=23 // pred_check_branch
          %176 = sbr.rel (%p174) target = $region40
        $region39: #{tpu_custom_call.1} parent=23 // pred_region
          _
        $region40: #{tpu_custom_call.1} parent=23 // pred_fallthru
          _
      $region24: #{tpu_custom_call.1} parent=5 // pred_fallthru
        _
      %p177 = scmp.le.s32.totalorder 2, %s10
      // Predicated region
      $region41: #{tpu_custom_call.1} parent=5 // pred_check
        %p178 = pneg %p177
      $region42: #{tpu_custom_call.1} parent=5 // pred_check_branch
        %180 = sbr.rel (%p178) target = $region44
      $region43: #{tpu_custom_call.1} parent=5 // pred_region
        %s181 = ssub.s32 %s10, 2
        // Predicated region
        $region45: #{tpu_custom_call.1} parent=43 // pred_check
          %p182 = pneg %p79
        $region46: #{tpu_custom_call.1} parent=43 // pred_check_branch
          %184 = sbr.rel (%p182) target = $region48
        $region47: #{tpu_custom_call.1} parent=43 // pred_region
          %p185 = scmp.lt.s32.totalorder %s21, 1
          %s186 = scalar_select %p185, %s21, 1
          %s187 = smul.addr %s186, 8
          %s188 = scalar_lea.vmem %s1, %s187
        $region48: #{tpu_custom_call.1} parent=43 // pred_fallthru
          _
      $region44: #{tpu_custom_call.1} parent=5 // pred_fallthru
        _
    $region6: #{tpu_custom_call.1} parent=1 // loop_footer
      %s14 = sadd.s32 1, %s10
    $region7: #{tpu_custom_call.1} parent=1 // loop_footer_branch
      %9 = sbr.rel target = $region3
    $region8: #{tpu_custom_call.1} parent=1 // loop_exit
      _
    %189 = vsyncpa [#allocation4], 1
    %s190 = scalar_lea.sflag [#allocation4], 1
    %191 = vsyncpa %s190, 1

</llo_original>
